<compile_context>
chip_gen: v5e
topology: v5e:2x2
jax: 0.10.0
libtpu: 0.0.40
codegen_flags: <defaults>
</compile_context>

<pallas_src>
import functools

import jax
import jax.numpy as jnp
from jax.experimental import pallas as pl
from jax.experimental.pallas import tpu as pltpu


# ----------------------------------------------------------------------------
# helpers
# ----------------------------------------------------------------------------
def _round_up(x, m):
    return (x + m - 1) // m * m


def _choose_tm(m):
    """M tile + padded M.  Invariant: M_pad < 256 -> tm == M_pad, else M_pad % 256 == 0."""
    tm = min(256, _round_up(m, 8))
    return tm, _round_up(m, tm)


def _choose_row_tile(m_pad):
    """Largest row tile (<=1024) that divides m_pad (m_pad obeys _choose_tm invariant)."""
    for t in (1024, 512, 256):
        if m_pad >= t and m_pad % t == 0:
            return t
    return m_pad


def _pad2d(x, rows, cols):
    r, c = x.shape
    return jnp.pad(x, ((0, rows - r), (0, cols - c)))


# ----------------------------------------------------------------------------
# kernel 1: tiled matmul (bf16 -> f32 acc) + per-channel sum / sum-of-squares
# ----------------------------------------------------------------------------
def _matmul_stats_kernel(a_ref, w_ref, c_ref, stats_ref, acc_ref):
    k = pl.program_id(2)  # K tile (reduction, innermost)

    @pl.when(k == 0)
    def _():
        acc_ref[...] = jnp.zeros_like(acc_ref)

    acc_ref[...] += jnp.dot(a_ref[...], w_ref[...],
                            preferred_element_type=jnp.float32)

    @pl.when(k == pl.num_programs(2) - 1)
    def _():
        acc = acc_ref[...]
        c_ref[...] = acc.astype(c_ref.dtype)

        col_sum = jnp.sum(acc, axis=0, keepdims=True)        # (1, tn)
        col_sq = jnp.sum(acc * acc, axis=0, keepdims=True)   # (1, tn)
        pad = jnp.zeros((6, col_sum.shape[1]), jnp.float32)
        stats_ref[...] = jnp.concatenate([col_sum, col_sq, pad], axis=0)  # (8, tn)


def matmul_stats(a, w, out_dtype=jnp.bfloat16):
    """a:(M,K), w:(K,N) -> (c (M_pad,N_pad) out_dtype, stats (8,N_pad) f32, (M_pad,N_pad))."""
    M, K = a.shape
    K2, N = w.shape
    assert K == K2
    tm, M_pad = _choose_tm(M)
    K_pad = _round_up(K, 128)
    N_pad = _round_up(N, 128)
    tk = min(512, K_pad)
    while K_pad % tk != 0:
        tk -= 128
    tn = min(256, N_pad)
    while N_pad % tn != 0:
        tn -= 128

    a_p = _pad2d(a, M_pad, K_pad).astype(jnp.bfloat16)
    w_p = _pad2d(w, K_pad, N_pad).astype(jnp.bfloat16)

    n_m = M_pad // tm
    grid = (N_pad // tn, n_m, K_pad // tk)
    flops = 2 * M_pad * K_pad * N_pad
    bytes_acc = ((M_pad * K_pad + K_pad * N_pad) * 2
                 + M_pad * N_pad * jnp.dtype(out_dtype).itemsize
                 + 8 * n_m * N_pad * 4)

    c, stats_part = pl.pallas_call(
        _matmul_stats_kernel,
        out_shape=(jax.ShapeDtypeStruct((M_pad, N_pad), out_dtype),
                   jax.ShapeDtypeStruct((8 * n_m, N_pad), jnp.float32)),
        grid_spec=pltpu.PrefetchScalarGridSpec(
            num_scalar_prefetch=0,
            grid=grid,
            in_specs=[pl.BlockSpec((tm, tk), lambda j, i, k: (i, k)),
                      pl.BlockSpec((tk, tn), lambda j, i, k: (k, j))],
            out_specs=(pl.BlockSpec((tm, tn), lambda j, i, k: (i, j)),
                       pl.BlockSpec((8, tn), lambda j, i, k: (i, j))),
            scratch_shapes=[pltpu.VMEM((tm, tn), jnp.float32)]),
        compiler_params=pltpu.CompilerParams(
            dimension_semantics=("parallel", "parallel", "arbitrary")),
        cost_estimate=pl.CostEstimate(flops=int(flops), transcendentals=0,
                                      bytes_accessed=int(bytes_acc)),
    )(a_p, w_p)

    stats = stats_part.reshape(n_m, 8, N_pad).sum(axis=0)   # tiny host-side reduce
    return c, stats, (M_pad, N_pad)


# ----------------------------------------------------------------------------
# kernel 2: elementwise BN-apply (+ fused residual BN) (+ ReLU), tiled over M
# ----------------------------------------------------------------------------
def _bn_apply_kernel(c_ref, s_ref, t_ref, o_ref, *, relu):
    out = c_ref[...].astype(jnp.float32) * s_ref[...] + t_ref[...]
    if relu:
        out = jnp.maximum(out, 0.0)
    o_ref[...] = out.astype(o_ref.dtype)


def _bn_apply_res_kernel(c_ref, s_ref, t_ref, r_ref, rs_ref, rt_ref, o_ref, *, relu):
    out = c_ref[...].astype(jnp.float32) * s_ref[...] + t_ref[...]
    out = out + r_ref[...].astype(jnp.float32) * rs_ref[...] + rt_ref[...]
    if relu:
        out = jnp.maximum(out, 0.0)
    o_ref[...] = out.astype(o_ref.dtype)


def bn_apply(c, scale, shift, residual=None, res_scale=None, res_shift=None,
             relu=True, out_dtype=jnp.float32):
    M_pad, N_pad = c.shape
    tm = _choose_row_tile(M_pad)
    grid = (M_pad // tm,)
    row_spec = pl.BlockSpec((tm, N_pad), lambda i: (i, 0))
    vec_spec = pl.BlockSpec((1, N_pad), lambda i: (0, 0))

    if residual is None:
        kernel = functools.partial(_bn_apply_kernel, relu=relu)
        in_specs = [row_spec, vec_spec, vec_spec]
        args = (c, scale, shift)
    else:
        kernel = functools.partial(_bn_apply_res_kernel, relu=relu)
        in_specs = [row_spec, vec_spec, vec_spec, row_spec, vec_spec, vec_spec]
        args = (c, scale, shift, residual, res_scale, res_shift)

    return pl.pallas_call(
        kernel,
        out_shape=jax.ShapeDtypeStruct((M_pad, N_pad), out_dtype),
        grid=grid,
        in_specs=in_specs,
        out_specs=row_spec,
        compiler_params=pltpu.CompilerParams(dimension_semantics=("parallel",)),
    )(*args)


# ----------------------------------------------------------------------------
# host-side plumbing: im2col, weight reshape, BN scale/shift from stats
# ----------------------------------------------------------------------------
def im2col3x3(x_nhwc, stride):
    """3x3, padding=1 im2col. Patch channel order = (kh*3 + kw)*C + c."""
    Nb, H, W, C = x_nhwc.shape
    xp = jnp.pad(x_nhwc, ((0, 0), (1, 1), (1, 1), (0, 0)))
    Ho = (H + 2 - 3) // stride + 1
    Wo = (W + 2 - 3) // stride + 1
    cols = []
    for kh in range(3):
        for kw in range(3):
            cols.append(
                xp[:, kh:kh + stride * (Ho - 1) + 1:stride,
                      kw:kw + stride * (Wo - 1) + 1:stride, :])
    patches = jnp.concatenate(cols, axis=-1)               # (Nb, Ho, Wo, 9*C)
    return patches.reshape(Nb * Ho * Wo, 9 * C), (Nb, Ho, Wo)


def _w3x3_to_mat(w):
    # (Cout, Cin, KH, KW) -> (KH*KW*Cin, Cout), matching im2col channel order
    cout, cin, kh, kw = w.shape
    return jnp.transpose(w, (2, 3, 1, 0)).reshape(kh * kw * cin, cout)


def _scale_shift(stats, gamma, beta, m_total, n, n_pad, eps):
    """Training-mode BN: biased batch variance; returns per-channel affine (1, n_pad)."""
    col_sum = stats[0, :n]
    col_sq = stats[1, :n]
    mean = col_sum / m_total
    var = jnp.maximum(col_sq / m_total - mean * mean, 0.0)
    inv = jax.lax.rsqrt(var + eps)
    scale = gamma.astype(jnp.float32) * inv
    shift = beta.astype(jnp.float32) - mean * scale
    scale = jnp.pad(scale, (0, n_pad - n)).reshape(1, n_pad)
    shift = jnp.pad(shift, (0, n_pad - n)).reshape(1, n_pad)
    return scale, shift


# ----------------------------------------------------------------------------
# BasicBlock forward: relu(bn2(conv2(relu(bn1(conv1 x)))) + shortcut(x))
# ----------------------------------------------------------------------------
def basic_block_forward(x_nchw, params, stride, eps=1e-5):
    x = jnp.transpose(x_nchw, (0, 2, 3, 1))          # NCHW -> NHWC
    Nb, H, W, Cin = x.shape
    planes = params["conv1_w"].shape[0]

    # ---- conv1 (3x3, stride) + bn1 + relu -------------------------------
    p1, (nb, ho, wo) = im2col3x3(x, stride)
    M = nb * ho * wo
    w1 = _w3x3_to_mat(params["conv1_w"])
    c1, stats1, (M_pad, N_pad) = matmul_stats(p1, w1)
    s1, t1 = _scale_shift(stats1, params["bn1_g"], params["bn1_b"], M, planes, N_pad, eps)
    out1 = bn_apply(c1, s1, t1, relu=True, out_dtype=jnp.bfloat16)   # feeds next MXU
    out1_nhwc = out1[:M, :planes].reshape(nb, ho, wo, planes)

    # ---- shortcut branch -------------------------------------------------
    if stride != 1 or Cin != planes:
        xs = x[:, ::stride, ::stride, :].reshape(M, Cin)              # 1x1 strided conv
        ws = jnp.transpose(params["sc_w"], (2, 3, 1, 0)).reshape(Cin, planes)
        c_sc, stats_sc, _ = matmul_stats(xs, ws)
        rs, rt = _scale_shift(stats_sc, params["sc_bn_g"], params["sc_bn_b"],
                              M, planes, N_pad, eps)
        res = c_sc                                                    # (M_pad, N_pad) bf16
    else:
        res = _pad2d(x.reshape(M, Cin), M_pad, N_pad).astype(jnp.bfloat16)
        rs = jnp.ones((1, N_pad), jnp.float32)
        rt = jnp.zeros((1, N_pad), jnp.float32)

    # ---- conv2 (3x3, stride 1) + bn2 + residual (its BN fused) + relu ----
    p2, _ = im2col3x3(out1_nhwc, 1)
    w2 = _w3x3_to_mat(params["conv2_w"])
    c2, stats2, _ = matmul_stats(p2, w2)
    s2, t2 = _scale_shift(stats2, params["bn2_g"], params["bn2_b"], M, planes, N_pad, eps)
    out2 = bn_apply(c2, s2, t2, residual=res, res_scale=rs, res_shift=rt,
                    relu=True, out_dtype=jnp.float32)

    out_nhwc = out2[:M, :planes].reshape(nb, ho, wo, planes)
    return jnp.transpose(out_nhwc, (0, 3, 1, 2))       # NHWC -> NCHW


# ----------------------------------------------------------------------------
# params + pure-JAX reference (for a correctness check in __main__)
# ----------------------------------------------------------------------------
def init_params(key, in_planes, planes):
    ks = jax.random.split(key, 8)
    return {
        "conv1_w": 0.1 * jax.random.normal(ks[0], (planes, in_planes, 3, 3), jnp.float32),
        "bn1_g": 1.0 + 0.1 * jax.random.normal(ks[1], (planes,), jnp.float32),
        "bn1_b": 0.1 * jax.random.normal(ks[2], (planes,), jnp.float32),
        "conv2_w": 0.1 * jax.random.normal(ks[3], (planes, planes, 3, 3), jnp.float32),
        "bn2_g": 1.0 + 0.1 * jax.random.normal(ks[4], (planes,), jnp.float32),
        "bn2_b": 0.1 * jax.random.normal(ks[5], (planes,), jnp.float32),
        "sc_w": 0.1 * jax.random.normal(ks[6], (planes, in_planes, 1, 1), jnp.float32),
        "sc_bn_g": jnp.ones((planes,), jnp.float32),
        "sc_bn_b": 0.05 * jax.random.normal(ks[7], (planes,), jnp.float32),
    }


def _reference_block(x_nchw, params, stride, eps=1e-5):
    def conv(x, w, s, pad):
        return jax.lax.conv_general_dilated(
            x, w, window_strides=(s, s), padding=[(pad, pad), (pad, pad)],
            dimension_numbers=("NCHW", "OIHW", "NCHW"))

    def bn(x, g, b):
        mean = jnp.mean(x, axis=(0, 2, 3), keepdims=True)
        var = jnp.mean(jnp.square(x - mean), axis=(0, 2, 3), keepdims=True)
        xh = (x - mean) * jax.lax.rsqrt(var + eps)
        return xh * g.reshape(1, -1, 1, 1) + b.reshape(1, -1, 1, 1)

    out = jax.nn.relu(bn(conv(x_nchw, params["conv1_w"], stride, 1),
                         params["bn1_g"], params["bn1_b"]))
    out = bn(conv(out, params["conv2_w"], 1, 1), params["bn2_g"], params["bn2_b"])
    cin, planes = x_nchw.shape[1], params["conv1_w"].shape[0]
    if stride != 1 or cin != planes:
        sc = bn(conv(x_nchw, params["sc_w"], stride, 0),
                params["sc_bn_g"], params["sc_bn_b"])
    else:
        sc = x_nchw
    return jax.nn.relu(out + sc)


if __name__ == "__main__":
    key = jax.random.PRNGKey(0)
    k_x, k_p, k_x2, k_p2 = jax.random.split(key, 4)

    fwd = jax.jit(basic_block_forward, static_argnums=2)

    # Case 1: projection shortcut (stride=2, channel change).
    batch, in_planes, planes, spatial, stride = 2, 4, 8, 16, 2
    x = jax.random.normal(k_x, (batch, in_planes, spatial, spatial), jnp.float32)
    params = init_params(k_p, in_planes, planes)
    out = jax.block_until_ready(fwd(x, params, stride))
    assert out.shape == (batch, planes, spatial // stride, spatial // stride), out.shape
    assert bool(jnp.all(out >= 0.0))
    ref = _reference_block(x, params, stride)
    assert bool(jnp.allclose(out, ref, atol=0.1, rtol=0.1)), \
        float(jnp.max(jnp.abs(out - ref)))

    # Case 2: identity shortcut (stride=1, in_planes == planes).
    batch2, planes2, spatial2 = 2, 8, 16
    x2 = jax.random.normal(k_x2, (batch2, planes2, spatial2, spatial2), jnp.float32)
    params2 = init_params(k_p2, planes2, planes2)
    out2 = jax.block_until_ready(fwd(x2, params2, 1))
    assert out2.shape == (batch2, planes2, spatial2, spatial2), out2.shape
    assert bool(jnp.all(out2 >= 0.0))
    ref2 = _reference_block(x2, params2, 1)
    assert bool(jnp.allclose(out2, ref2, atol=0.1, rtol=0.1)), \
        float(jnp.max(jnp.abs(out2 - ref2)))

    print("KERNEL_OK")
</pallas_src>

<mosaic_0001>
module attributes {stable_mosaic.version = 11 : i64} {
  func.func @_matmul_stats_kernel(%arg0: i32, %arg1: i32, %arg2: i32, %arg3: memref<128x128xbf16, #tpu.memory_space<vmem>>, %arg4: memref<128x128xbf16, #tpu.memory_space<vmem>>, %arg5: memref<128x128xbf16, #tpu.memory_space<vmem>>, %arg6: memref<8x128xf32, #tpu.memory_space<vmem>>, %arg7: memref<128x128xf32, #tpu.memory_space<vmem>>) attributes {dimension_semantics = [#tpu.dimension_semantics<parallel>, #tpu.dimension_semantics<parallel>, #tpu.dimension_semantics<arbitrary>], iteration_bounds = array<i64: 1, 1, 1>, scalar_prefetch = 0 : i64, scratch_operands = 1 : i64, tpu.core_type = #tpu.core_type<tc>, window_params = [{transform_indices = @transform_0, window_bounds = array<i64: 128, 128>}, {transform_indices = @transform_1, window_bounds = array<i64: 128, 128>}, {transform_indices = @transform_2, window_bounds = array<i64: 128, 128>}, {transform_indices = @transform_3, window_bounds = array<i64: 8, 128>}]} {
    %c0_i32 = arith.constant 0 : i32
    %0 = arith.cmpi eq, %arg2, %c0_i32 : i32
    %1 = arith.extui %0 : i1 to i32
    %c0_i32_0 = arith.constant 0 : i32
    %2 = arith.cmpi ne, %1, %c0_i32_0 : i32
    scf.if %2 {
      %cst_10 = arith.constant 0.000000e+00 : f32
      %12 = vector.broadcast %cst_10 : f32 to vector<128x128xf32>
      %c0_11 = arith.constant 0 : index
      %c0_12 = arith.constant 0 : index
      %13 = vector.load %arg7[%c0_11, %c0_12] : memref<128x128xf32, #tpu.memory_space<vmem>>, vector<128x128xf32>
      tpu.vector_store %arg7[%c0_11, %c0_12], %12 {strides = array<i32>} : memref<128x128xf32, #tpu.memory_space<vmem>>, vector<128x128xf32>,
    } else {
    }
    %c0 = arith.constant 0 : index
    %c0_1 = arith.constant 0 : index
    %3 = vector.load %arg7[%c0, %c0_1] : memref<128x128xf32, #tpu.memory_space<vmem>>, vector<128x128xf32>
    %c0_2 = arith.constant 0 : index
    %c0_3 = arith.constant 0 : index
    %4 = vector.load %arg3[%c0_2, %c0_3] : memref<128x128xbf16, #tpu.memory_space<vmem>>, vector<128x128xbf16>
    %c0_4 = arith.constant 0 : index
    %c0_5 = arith.constant 0 : index
    %5 = vector.load %arg4[%c0_4, %c0_5] : memref<128x128xbf16, #tpu.memory_space<vmem>>, vector<128x128xbf16>
    %cst = arith.constant dense<0.000000e+00> : vector<128x128xf32>
    %6 = tpu.matmul %4, %5, %cst {dimension_numbers = #tpu.dot_dimension_numbers<[1], [0], [0], [1], [0, 0, 1, 1], [], []>} : vector<128x128xbf16>, vector<128x128xbf16>, vector<128x128xf32> -> vector<128x128xf32>
    %7 = arith.addf %3, %6 : vector<128x128xf32>
    %c0_6 = arith.constant 0 : index
    %c0_7 = arith.constant 0 : index
    %8 = vector.load %arg7[%c0_6, %c0_7] : memref<128x128xf32, #tpu.memory_space<vmem>>, vector<128x128xf32>
    tpu.vector_store %arg7[%c0_6, %c0_7], %7 {strides = array<i32>} : memref<128x128xf32, #tpu.memory_space<vmem>>, vector<128x128xf32>,
    %c0_i32_8 = arith.constant 0 : i32
    %9 = arith.cmpi eq, %arg2, %c0_i32_8 : i32
    %10 = arith.extui %9 : i1 to i32
    %c0_i32_9 = arith.constant 0 : i32
    %11 = arith.cmpi ne, %10, %c0_i32_9 : i32
    scf.if %11 {
      %c0_10 = arith.constant 0 : index
      %c0_11 = arith.constant 0 : index
      %12 = vector.load %arg7[%c0_10, %c0_11] : memref<128x128xf32, #tpu.memory_space<vmem>>, vector<128x128xf32>
      %13 = arith.truncf %12 : vector<128x128xf32> to vector<128x128xbf16>
      %c0_12 = arith.constant 0 : index
      %c0_13 = arith.constant 0 : index
      %14 = vector.load %arg5[%c0_12, %c0_13] : memref<128x128xbf16, #tpu.memory_space<vmem>>, vector<128x128xbf16>
      tpu.vector_store %arg5[%c0_12, %c0_13], %13 {strides = array<i32>} : memref<128x128xbf16, #tpu.memory_space<vmem>>, vector<128x128xbf16>,
      %cst_14 = arith.constant dense<0.000000e+00> : vector<128xf32>
      %15 = vector.multi_reduction <add>, %12, %cst_14 [0] : vector<128x128xf32> to vector<128xf32>
      %16 = vector.shape_cast %15 : vector<128xf32> to vector<1x128xf32>
      %17 = arith.mulf %12, %12 : vector<128x128xf32>
      %cst_15 = arith.constant dense<0.000000e+00> : vector<128xf32>
      %18 = vector.multi_reduction <add>, %17, %cst_15 [0] : vector<128x128xf32> to vector<128xf32>
      %19 = vector.shape_cast %18 : vector<128xf32> to vector<1x128xf32>
      %cst_16 = arith.constant 0.000000e+00 : f32
      %20 = vector.broadcast %cst_16 : f32 to vector<6x128xf32>
      %21 = tpu.concatenate %16, %19, %20 in 0 : vector<1x128xf32>, vector<1x128xf32>, vector<6x128xf32> -> vector<8x128xf32>
      %c0_17 = arith.constant 0 : index
      %c0_18 = arith.constant 0 : index
      %22 = vector.load %arg6[%c0_17, %c0_18] : memref<8x128xf32, #tpu.memory_space<vmem>>, vector<8x128xf32>
      tpu.vector_store %arg6[%c0_17, %c0_18], %21 {strides = array<i32>} : memref<8x128xf32, #tpu.memory_space<vmem>>, vector<8x128xf32>,
    } else {
    }
    return
  }
  func.func @transform_0(%arg0: i32, %arg1: i32, %arg2: i32) -> (i32, i32) {
    %c0_i32 = arith.constant 0 : i32
    return %arg1, %arg2 : i32, i32
  }
  func.func @transform_1(%arg0: i32, %arg1: i32, %arg2: i32) -> (i32, i32) {
    %c0_i32 = arith.constant 0 : i32
    return %arg2, %arg0 : i32, i32
  }
  func.func @transform_2(%arg0: i32, %arg1: i32, %arg2: i32) -> (i32, i32) {
    %c0_i32 = arith.constant 0 : i32
    return %arg1, %arg0 : i32, i32
  }
  func.func @transform_3(%arg0: i32, %arg1: i32, %arg2: i32) -> (i32, i32) {
    %c0_i32 = arith.constant 0 : i32
    return %arg1, %arg0 : i32, i32
  }
}

module attributes {stable_mosaic.version = 11 : i64} {
  func.func @_bn_apply_kernel(%arg0: i32, %arg1: memref<128x128xbf16, #tpu.memory_space<vmem>>, %arg2: memref<1x128xf32, #tpu.memory_space<vmem>>, %arg3: memref<1x128xf32, #tpu.memory_space<vmem>>, %arg4: memref<128x128xbf16, #tpu.memory_space<vmem>>) attributes {dimension_semantics = [#tpu.dimension_semantics<parallel>], iteration_bounds = array<i64: 1>, scalar_prefetch = 0 : i64, scratch_operands = 0 : i64, tpu.core_type = #tpu.core_type<tc>, window_params = [{transform_indices = @transform_0, window_bounds = array<i64: 128, 128>}, {pipeline_mode = #tpu.pipeline_mode<synchronous>, transform_indices = @transform_1, window_bounds = array<i64: 1, 128>}, {pipeline_mode = #tpu.pipeline_mode<synchronous>, transform_indices = @transform_2, window_bounds = array<i64: 1, 128>}, {transform_indices = @transform_3, window_bounds = array<i64: 128, 128>}]} {
    %c0 = arith.constant 0 : index
    %c0_0 = arith.constant 0 : index
    %0 = vector.load %arg1[%c0, %c0_0] : memref<128x128xbf16, #tpu.memory_space<vmem>>, vector<128x128xbf16>
    %1 = arith.extf %0 : vector<128x128xbf16> to vector<128x128xf32>
    %c0_1 = arith.constant 0 : index
    %c0_2 = arith.constant 0 : index
    %2 = vector.load %arg2[%c0_1, %c0_2] : memref<1x128xf32, #tpu.memory_space<vmem>>, vector<1x128xf32>
    %3 = vector.broadcast %2 : vector<1x128xf32> to vector<128x128xf32>
    %4 = arith.mulf %1, %3 : vector<128x128xf32>
    %c0_3 = arith.constant 0 : index
    %c0_4 = arith.constant 0 : index
    %5 = vector.load %arg3[%c0_3, %c0_4] : memref<1x128xf32, #tpu.memory_space<vmem>>, vector<1x128xf32>
    %6 = vector.broadcast %5 : vector<1x128xf32> to vector<128x128xf32>
    %7 = arith.addf %4, %6 : vector<128x128xf32>
    %cst = arith.constant 0.000000e+00 : f32
    %8 = vector.broadcast %cst : f32 to vector<128x128xf32>
    %9 = arith.maximumf %7, %8 : vector<128x128xf32>
    %10 = arith.truncf %9 : vector<128x128xf32> to vector<128x128xbf16>
    %c0_5 = arith.constant 0 : index
    %c0_6 = arith.constant 0 : index
    %11 = vector.load %arg4[%c0_5, %c0_6] : memref<128x128xbf16, #tpu.memory_space<vmem>>, vector<128x128xbf16>
    tpu.vector_store %arg4[%c0_5, %c0_6], %10 {strides = array<i32>} : memref<128x128xbf16, #tpu.memory_space<vmem>>, vector<128x128xbf16>,
    return
  }
  func.func @transform_0(%arg0: i32) -> (i32, i32) {
    %c0_i32 = arith.constant 0 : i32
    %c0_i32_0 = arith.constant 0 : i32
    return %arg0, %c0_i32 : i32, i32
  }
  func.func @transform_1(%arg0: i32) -> (i32, i32) {
    %c0_i32 = arith.constant 0 : i32
    %c0_i32_0 = arith.constant 0 : i32
    %c0_i32_1 = arith.constant 0 : i32
    return %c0_i32, %c0_i32_0 : i32, i32
  }
  func.func @transform_2(%arg0: i32) -> (i32, i32) {
    %c0_i32 = arith.constant 0 : i32
    %c0_i32_0 = arith.constant 0 : i32
    %c0_i32_1 = arith.constant 0 : i32
    return %c0_i32, %c0_i32_0 : i32, i32
  }
  func.func @transform_3(%arg0: i32) -> (i32, i32) {
    %c0_i32 = arith.constant 0 : i32
    %c0_i32_0 = arith.constant 0 : i32
    return %arg0, %c0_i32 : i32, i32
  }
}

module attributes {stable_mosaic.version = 11 : i64} {
  func.func @_bn_apply_res_kernel(%arg0: i32, %arg1: memref<128x128xbf16, #tpu.memory_space<vmem>>, %arg2: memref<1x128xf32, #tpu.memory_space<vmem>>, %arg3: memref<1x128xf32, #tpu.memory_space<vmem>>, %arg4: memref<128x128xbf16, #tpu.memory_space<vmem>>, %arg5: memref<1x128xf32, #tpu.memory_space<vmem>>, %arg6: memref<1x128xf32, #tpu.memory_space<vmem>>, %arg7: memref<128x128xf32, #tpu.memory_space<vmem>>) attributes {dimension_semantics = [#tpu.dimension_semantics<parallel>], iteration_bounds = array<i64: 1>, scalar_prefetch = 0 : i64, scratch_operands = 0 : i64, tpu.core_type = #tpu.core_type<tc>, window_params = [{transform_indices = @transform_0, window_bounds = array<i64: 128, 128>}, {pipeline_mode = #tpu.pipeline_mode<synchronous>, transform_indices = @transform_1, window_bounds = array<i64: 1, 128>}, {pipeline_mode = #tpu.pipeline_mode<synchronous>, transform_indices = @transform_2, window_bounds = array<i64: 1, 128>}, {transform_indices = @transform_3, window_bounds = array<i64: 128, 128>}, {pipeline_mode = #tpu.pipeline_mode<synchronous>, transform_indices = @transform_4, window_bounds = array<i64: 1, 128>}, {pipeline_mode = #tpu.pipeline_mode<synchronous>, transform_indices = @transform_5, window_bounds = array<i64: 1, 128>}, {transform_indices = @transform_6, window_bounds = array<i64: 128, 128>}]} {
    %c0 = arith.constant 0 : index
    %c0_0 = arith.constant 0 : index
    %0 = vector.load %arg1[%c0, %c0_0] : memref<128x128xbf16, #tpu.memory_space<vmem>>, vector<128x128xbf16>
    %1 = arith.extf %0 : vector<128x128xbf16> to vector<128x128xf32>
    %c0_1 = arith.constant 0 : index
    %c0_2 = arith.constant 0 : index
    %2 = vector.load %arg2[%c0_1, %c0_2] : memref<1x128xf32, #tpu.memory_space<vmem>>, vector<1x128xf32>
    %3 = vector.broadcast %2 : vector<1x128xf32> to vector<128x128xf32>
    %4 = arith.mulf %1, %3 : vector<128x128xf32>
    %c0_3 = arith.constant 0 : index
    %c0_4 = arith.constant 0 : index
    %5 = vector.load %arg3[%c0_3, %c0_4] : memref<1x128xf32, #tpu.memory_space<vmem>>, vector<1x128xf32>
    %6 = vector.broadcast %5 : vector<1x128xf32> to vector<128x128xf32>
    %7 = arith.addf %4, %6 : vector<128x128xf32>
    %c0_5 = arith.constant 0 : index
    %c0_6 = arith.constant 0 : index
    %8 = vector.load %arg4[%c0_5, %c0_6] : memref<128x128xbf16, #tpu.memory_space<vmem>>, vector<128x128xbf16>
    %9 = arith.extf %8 : vector<128x128xbf16> to vector<128x128xf32>
    %c0_7 = arith.constant 0 : index
    %c0_8 = arith.constant 0 : index
    %10 = vector.load %arg5[%c0_7, %c0_8] : memref<1x128xf32, #tpu.memory_space<vmem>>, vector<1x128xf32>
    %11 = vector.broadcast %10 : vector<1x128xf32> to vector<128x128xf32>
    %12 = arith.mulf %9, %11 : vector<128x128xf32>
    %13 = arith.addf %7, %12 : vector<128x128xf32>
    %c0_9 = arith.constant 0 : index
    %c0_10 = arith.constant 0 : index
    %14 = vector.load %arg6[%c0_9, %c0_10] : memref<1x128xf32, #tpu.memory_space<vmem>>, vector<1x128xf32>
    %15 = vector.broadcast %14 : vector<1x128xf32> to vector<128x128xf32>
    %16 = arith.addf %13, %15 : vector<128x128xf32>
    %cst = arith.constant 0.000000e+00 : f32
    %17 = vector.broadcast %cst : f32 to vector<128x128xf32>
    %18 = arith.maximumf %16, %17 : vector<128x128xf32>
    %c0_11 = arith.constant 0 : index
    %c0_12 = arith.constant 0 : index
    %19 = vector.load %arg7[%c0_11, %c0_12] : memref<128x128xf32, #tpu.memory_space<vmem>>, vector<128x128xf32>
    tpu.vector_store %arg7[%c0_11, %c0_12], %18 {strides = array<i32>} : memref<128x128xf32, #tpu.memory_space<vmem>>, vector<128x128xf32>,
    return
  }
  func.func @transform_0(%arg0: i32) -> (i32, i32) {
    %c0_i32 = arith.constant 0 : i32
    %c0_i32_0 = arith.constant 0 : i32
    return %arg0, %c0_i32 : i32, i32
  }
  func.func @transform_1(%arg0: i32) -> (i32, i32) {
    %c0_i32 = arith.constant 0 : i32
    %c0_i32_0 = arith.constant 0 : i32
    %c0_i32_1 = arith.constant 0 : i32
    return %c0_i32, %c0_i32_0 : i32, i32
  }
  func.func @transform_2(%arg0: i32) -> (i32, i32) {
    %c0_i32 = arith.constant 0 : i32
    %c0_i32_0 = arith.constant 0 : i32
    %c0_i32_1 = arith.constant 0 : i32
    return %c0_i32, %c0_i32_0 : i32, i32
  }
  func.func @transform_3(%arg0: i32) -> (i32, i32) {
    %c0_i32 = arith.constant 0 : i32
    %c0_i32_0 = arith.constant 0 : i32
    return %arg0, %c0_i32 : i32, i32
  }
  func.func @transform_4(%arg0: i32) -> (i32, i32) {
    %c0_i32 = arith.constant 0 : i32
    %c0_i32_0 = arith.constant 0 : i32
    %c0_i32_1 = arith.constant 0 : i32
    return %c0_i32, %c0_i32_0 : i32, i32
  }
  func.func @transform_5(%arg0: i32) -> (i32, i32) {
    %c0_i32 = arith.constant 0 : i32
    %c0_i32_0 = arith.constant 0 : i32
    %c0_i32_1 = arith.constant 0 : i32
    return %c0_i32, %c0_i32_0 : i32, i32
  }
  func.func @transform_6(%arg0: i32) -> (i32, i32) {
    %c0_i32 = arith.constant 0 : i32
    %c0_i32_0 = arith.constant 0 : i32
    return %arg0, %c0_i32 : i32, i32
  }
}

</mosaic_0001>

<llo_original>
// kernel: basic_block_forward.6
$region0: #{basic_block_forward.6}
  #allocation0 [shape = 'u32[]', space=smem, size = 0x4, offset = 0x4, fixed_abs, tag = 'smem constant byte address 0x4 - core index']
  #allocation1 [shape = 'u32[72,128]{1,0:T(1,128)}', space=vmem, size = 0x9000, scoped, tag = 'internal scratch']
  %s0 = inlined_call_operand.vmem [shape: bf16[128,128], index: 0, kind: input, shape index: {}]
  %s1 = inlined_call_operand.vmem [shape: f32[1,128], index: 1, kind: input, shape index: {}]
  %s2 = inlined_call_operand.vmem [shape: f32[1,128], index: 2, kind: input, shape index: {}]
  %s3 = inlined_call_operand.vmem [shape: bf16[128,128], index: 3, kind: output, shape index: {}]
  %s4 = sld [smem:[#allocation0]]
  $region22: #{basic_block_forward.6} parent=0
    _
  %s6 = ssub.s32 1, %s4
  %s7 = scalar_select 0, %s6, %s4
  // Predicated region
  $region2: #{basic_block_forward.6} parent=0 // pred_check
    _
  $region3: #{basic_block_forward.6} parent=0 // pred_check_branch
    %9 = sbr.rel (0) target = $region5
  $region4: #{basic_block_forward.6} parent=0 // pred_region
    _
  $region5: #{basic_block_forward.6} parent=0 // pred_fallthru
    _
  // Predicated region
  $region6: #{basic_block_forward.6} parent=0 // pred_check
    _
  $region7: #{basic_block_forward.6} parent=0 // pred_check_branch
    %11 = sbr.rel (0) target = $region9
  $region8: #{basic_block_forward.6} parent=0 // pred_region
    _
  $region9: #{basic_block_forward.6} parent=0 // pred_fallthru
    _
  // Predicated region
  $region10: #{basic_block_forward.6} parent=0 // pred_check
    _
  $region11: #{basic_block_forward.6} parent=0 // pred_check_branch
    %13 = sbr.rel (0) target = $region13
  $region12: #{basic_block_forward.6} parent=0 // pred_region
    _
  $region13: #{basic_block_forward.6} parent=0 // pred_fallthru
    _
  %v14 = vld [vmem:[%s0] sm:$0xf]
  %v15 = vld [vmem:[%s0 + $0x4] sm:$0xf]
  %v16 = vld [vmem:[%s0 + $0x8] sm:$0xf]
  %v17 = vld [vmem:[%s0 + $0xc] sm:$0xf]
  %v18 = vld [vmem:[%s0 + $0x10] sm:$0xf]
  %v19 = vld [vmem:[%s0 + $0x14] sm:$0xf]
  %v20 = vld [vmem:[%s0 + $0x18] sm:$0xf]
  %v21 = vld [vmem:[%s0 + $0x1c] sm:$0xf]
  %v22 = vld [vmem:[%s0 + $0x20] sm:$0xf]
  %v23 = vld [vmem:[%s0 + $0x24] sm:$0xf]
  %v24 = vld [vmem:[%s0 + $0x28] sm:$0xf]
  %v25 = vld [vmem:[%s0 + $0x2c] sm:$0xf]
  %v26 = vld [vmem:[%s0 + $0x30] sm:$0xf]
  %v27 = vld [vmem:[%s0 + $0x34] sm:$0xf]
  %v28 = vld [vmem:[%s0 + $0x38] sm:$0xf]
  %v29 = vld [vmem:[%s0 + $0x3c] sm:$0xf]
  %v30 = vunpack.c.l.bf16 %v14
  %v31 = vunpack.c.l.bf16 %v15
  %v32 = vunpack.c.l.bf16 %v16
  %v33 = vunpack.c.l.bf16 %v17
  %v34 = vunpack.c.l.bf16 %v18
  %v35 = vunpack.c.l.bf16 %v19
  %v36 = vunpack.c.l.bf16 %v20
  %v37 = vunpack.c.l.bf16 %v21
  %v38 = vunpack.c.l.bf16 %v22
  %v39 = vunpack.c.l.bf16 %v23
  %v40 = vunpack.c.l.bf16 %v24
  %v41 = vunpack.c.l.bf16 %v25
  %v42 = vunpack.c.l.bf16 %v26
  %v43 = vunpack.c.l.bf16 %v27
  %v44 = vunpack.c.l.bf16 %v28
  %v45 = vunpack.c.l.bf16 %v29
  %v46 = vld [vmem:[%s1] sm:$0x1]
  %v48 = vperm.slane %v46, 0
  %v50 = vmul.f32 %v30, %v48
  %v51 = vmul.f32 %v31, %v48
  %v52 = vmul.f32 %v32, %v48
  %v53 = vmul.f32 %v33, %v48
  %v54 = vmul.f32 %v34, %v48
  %v55 = vmul.f32 %v35, %v48
  %v56 = vmul.f32 %v36, %v48
  %v57 = vmul.f32 %v37, %v48
  %v58 = vmul.f32 %v38, %v48
  %v59 = vmul.f32 %v39, %v48
  %v60 = vmul.f32 %v40, %v48
  %v61 = vmul.f32 %v41, %v48
  %v62 = vmul.f32 %v42, %v48
  %v63 = vmul.f32 %v43, %v48
  %v64 = vmul.f32 %v44, %v48
  %v65 = vmul.f32 %v45, %v48
  %v66 = vld [vmem:[%s2] sm:$0x1]
  %v68 = vperm.slane %v66, 0
  %v70 = vadd.f32 %v50, %v68
  %v71 = vadd.f32 %v51, %v68
  %v72 = vadd.f32 %v52, %v68
  %v73 = vadd.f32 %v53, %v68
  %v74 = vadd.f32 %v54, %v68
  %v75 = vadd.f32 %v55, %v68
  %v76 = vadd.f32 %v56, %v68
  %v77 = vadd.f32 %v57, %v68
  %v78 = vadd.f32 %v58, %v68
  %v79 = vadd.f32 %v59, %v68
  %v80 = vadd.f32 %v60, %v68
  %v81 = vadd.f32 %v61, %v68
  %v82 = vadd.f32 %v62, %v68
  %v83 = vadd.f32 %v63, %v68
  %v84 = vadd.f32 %v64, %v68
  %v85 = vadd.f32 %v65, %v68
  %v86 = vmax.f32 %v70, 0.0
  %v87 = vmax.f32 %v71, 0.0
  %v88 = vmax.f32 %v72, 0.0
  %v89 = vmax.f32 %v73, 0.0
  %v90 = vmax.f32 %v74, 0.0
  %v91 = vmax.f32 %v75, 0.0
  %v92 = vmax.f32 %v76, 0.0
  %v93 = vmax.f32 %v77, 0.0
  %v94 = vmax.f32 %v78, 0.0
  %v95 = vmax.f32 %v79, 0.0
  %v96 = vmax.f32 %v80, 0.0
  %v97 = vmax.f32 %v81, 0.0
  %v98 = vmax.f32 %v82, 0.0
  %v99 = vmax.f32 %v83, 0.0
  %v100 = vmax.f32 %v84, 0.0
  %v101 = vmax.f32 %v85, 0.0
  %v102 = vpack.c.bf16 %v86, %v86
  %v103 = vpack.c.bf16 %v87, %v87
  %v104 = vpack.c.bf16 %v88, %v88
  %v105 = vpack.c.bf16 %v89, %v89
  %v106 = vpack.c.bf16 %v90, %v90
  %v107 = vpack.c.bf16 %v91, %v91
  %v108 = vpack.c.bf16 %v92, %v92
  %v109 = vpack.c.bf16 %v93, %v93
  %v110 = vpack.c.bf16 %v94, %v94
  %v111 = vpack.c.bf16 %v95, %v95
  %v112 = vpack.c.bf16 %v96, %v96
  %v113 = vpack.c.bf16 %v97, %v97
  %v114 = vpack.c.bf16 %v98, %v98
  %v115 = vpack.c.bf16 %v99, %v99
  %v116 = vpack.c.bf16 %v100, %v100
  %v117 = vpack.c.bf16 %v101, %v101
  %118 = vst [vmem:[%s3] sm:$0xf] %v102
  %119 = vst [vmem:[%s3 + $0x4] sm:$0xf] %v103
  %120 = vst [vmem:[%s3 + $0x8] sm:$0xf] %v104
  %121 = vst [vmem:[%s3 + $0xc] sm:$0xf] %v105
  %122 = vst [vmem:[%s3 + $0x10] sm:$0xf] %v106
  %123 = vst [vmem:[%s3 + $0x14] sm:$0xf] %v107
  %124 = vst [vmem:[%s3 + $0x18] sm:$0xf] %v108
  %125 = vst [vmem:[%s3 + $0x1c] sm:$0xf] %v109
  %126 = vst [vmem:[%s3 + $0x20] sm:$0xf] %v110
  %127 = vst [vmem:[%s3 + $0x24] sm:$0xf] %v111
  %128 = vst [vmem:[%s3 + $0x28] sm:$0xf] %v112
  %129 = vst [vmem:[%s3 + $0x2c] sm:$0xf] %v113
  %130 = vst [vmem:[%s3 + $0x30] sm:$0xf] %v114
  %131 = vst [vmem:[%s3 + $0x34] sm:$0xf] %v115
  %132 = vst [vmem:[%s3 + $0x38] sm:$0xf] %v116
  %133 = vst [vmem:[%s3 + $0x3c] sm:$0xf] %v117
  // Predicated region
  $region14: #{basic_block_forward.6} parent=0 // pred_check
    _
  $region15: #{basic_block_forward.6} parent=0 // pred_check_branch
    %135 = sbr.rel (0) target = $region17
  $region16: #{basic_block_forward.6} parent=0 // pred_region
    _
  $region17: #{basic_block_forward.6} parent=0 // pred_fallthru
    _
  // Predicated region
  $region18: #{basic_block_forward.6} parent=0 // pred_check
    _
  $region19: #{basic_block_forward.6} parent=0 // pred_check_branch
    %137 = sbr.rel (0) target = $region21
  $region20: #{basic_block_forward.6} parent=0 // pred_region
    _
  $region21: #{basic_block_forward.6} parent=0 // pred_fallthru
    _

// kernel: basic_block_forward.7
$region0: #{basic_block_forward.7}
  #allocation0 [shape = 'u32[]', space=smem, size = 0x4, offset = 0x4, fixed_abs, tag = 'smem constant byte address 0x4 - core index']
  #allocation1 [shape = 'u32[72,128]{1,0:T(1,128)}', space=vmem, size = 0x9000, scoped, tag = 'internal scratch']
  #allocation2 [shape = 'f32[128,128]{1,0:T(8,128)}', space=vmem, size = 0x10000, scoped, tag = 'scratch operand']
  %s0 = inlined_call_operand.vmem [shape: bf16[128,128], index: 0, kind: input, shape index: {}]
  %s1 = inlined_call_operand.vmem [shape: bf16[128,128], index: 1, kind: input, shape index: {}]
  %s2 = inlined_call_operand.vmem [shape: bf16[128,128], index: 2, kind: output, shape index: {0}]
  %s3 = inlined_call_operand.vmem [shape: f32[8,128], index: 3, kind: output, shape index: {1}]
  %4 = xla_tuple %s2, %s3
  %s5 = sld [smem:[#allocation0]]
  $region34: #{basic_block_forward.7} parent=0
    _
  %s7 = ssub.s32 1, %s5
  %s8 = scalar_select 0, %s7, %s5
  // Predicated region
  $region2: #{basic_block_forward.7} parent=0 // pred_check
    _
  $region3: #{basic_block_forward.7} parent=0 // pred_check_branch
    %10 = sbr.rel (0) target = $region5
  $region4: #{basic_block_forward.7} parent=0 // pred_region
    _
  $region5: #{basic_block_forward.7} parent=0 // pred_fallthru
    _
  // Predicated region
  $region6: #{basic_block_forward.7} parent=0 // pred_check
    _
  $region7: #{basic_block_forward.7} parent=0 // pred_check_branch
    %12 = sbr.rel (0) target = $region9
  $region8: #{basic_block_forward.7} parent=0 // pred_region
    _
  $region9: #{basic_block_forward.7} parent=0 // pred_fallthru
    _
  %p13 = scmp.eq.s32.totalorder 0, 0
  // Predicated region
  $region10: #{basic_block_forward.7} parent=0 // pred_check
    %p14 = pneg %p13
  $region11: #{basic_block_forward.7} parent=0 // pred_check_branch
    %16 = sbr.rel (%p14) target = $region13
  $region12: #{basic_block_forward.7} parent=0 // pred_region
    %17 = vst [vmem:[#allocation2] sm:$0xff] 0.0
    %18 = vst [vmem:[#allocation2 + $0x8] sm:$0xff] 0.0
    %19 = vst [vmem:[#allocation2 + $0x10] sm:$0xff] 0.0
    %20 = vst [vmem:[#allocation2 + $0x18] sm:$0xff] 0.0
    %21 = vst [vmem:[#allocation2 + $0x20] sm:$0xff] 0.0
    %22 = vst [vmem:[#allocation2 + $0x28] sm:$0xff] 0.0
    %23 = vst [vmem:[#allocation2 + $0x30] sm:$0xff] 0.0
    %24 = vst [vmem:[#allocation2 + $0x38] sm:$0xff] 0.0
    %25 = vst [vmem:[#allocation2 + $0x40] sm:$0xff] 0.0
    %26 = vst [vmem:[#allocation2 + $0x48] sm:$0xff] 0.0
    %27 = vst [vmem:[#allocation2 + $0x50] sm:$0xff] 0.0
    %28 = vst [vmem:[#allocation2 + $0x58] sm:$0xff] 0.0
    %29 = vst [vmem:[#allocation2 + $0x60] sm:$0xff] 0.0
    %30 = vst [vmem:[#allocation2 + $0x68] sm:$0xff] 0.0
    %31 = vst [vmem:[#allocation2 + $0x70] sm:$0xff] 0.0
    %32 = vst [vmem:[#allocation2 + $0x78] sm:$0xff] 0.0
  $region13: #{basic_block_forward.7} parent=0 // pred_fallthru
    _
  %v33 = vld [vmem:[#allocation2] sm:$0xff]
  %v34 = vld [vmem:[#allocation2 + $0x8] sm:$0xff]
  %v35 = vld [vmem:[#allocation2 + $0x10] sm:$0xff]
  %v36 = vld [vmem:[#allocation2 + $0x18] sm:$0xff]
  %v37 = vld [vmem:[#allocation2 + $0x20] sm:$0xff]
  %v38 = vld [vmem:[#allocation2 + $0x28] sm:$0xff]
  %v39 = vld [vmem:[#allocation2 + $0x30] sm:$0xff]
  %v40 = vld [vmem:[#allocation2 + $0x38] sm:$0xff]
  %v41 = vld [vmem:[#allocation2 + $0x40] sm:$0xff]
  %v42 = vld [vmem:[#allocation2 + $0x48] sm:$0xff]
  %v43 = vld [vmem:[#allocation2 + $0x50] sm:$0xff]
  %v44 = vld [vmem:[#allocation2 + $0x58] sm:$0xff]
  %v45 = vld [vmem:[#allocation2 + $0x60] sm:$0xff]
  %v46 = vld [vmem:[#allocation2 + $0x68] sm:$0xff]
  %v47 = vld [vmem:[#allocation2 + $0x70] sm:$0xff]
  %v48 = vld [vmem:[#allocation2 + $0x78] sm:$0xff]
  %v49 = vld [vmem:[%s0] sm:$0xf]
  %v50 = vld [vmem:[%s0 + $0x4] sm:$0xf]
  %v51 = vld [vmem:[%s0 + $0x8] sm:$0xf]
  %v52 = vld [vmem:[%s0 + $0xc] sm:$0xf]
  %v53 = vld [vmem:[%s0 + $0x10] sm:$0xf]
  %v54 = vld [vmem:[%s0 + $0x14] sm:$0xf]
  %v55 = vld [vmem:[%s0 + $0x18] sm:$0xf]
  %v56 = vld [vmem:[%s0 + $0x1c] sm:$0xf]
  %v57 = vld [vmem:[%s0 + $0x20] sm:$0xf]
  %v58 = vld [vmem:[%s0 + $0x24] sm:$0xf]
  %v59 = vld [vmem:[%s0 + $0x28] sm:$0xf]
  %v60 = vld [vmem:[%s0 + $0x2c] sm:$0xf]
  %v61 = vld [vmem:[%s0 + $0x30] sm:$0xf]
  %v62 = vld [vmem:[%s0 + $0x34] sm:$0xf]
  %v63 = vld [vmem:[%s0 + $0x38] sm:$0xf]
  %v64 = vld [vmem:[%s0 + $0x3c] sm:$0xf]
  %v65 = vld [vmem:[%s1] sm:$0xf]
  %v66 = vld [vmem:[%s1 + $0x4] sm:$0xf]
  %v67 = vld [vmem:[%s1 + $0x8] sm:$0xf]
  %v68 = vld [vmem:[%s1 + $0xc] sm:$0xf]
  %v69 = vld [vmem:[%s1 + $0x10] sm:$0xf]
  %v70 = vld [vmem:[%s1 + $0x14] sm:$0xf]
  %v71 = vld [vmem:[%s1 + $0x18] sm:$0xf]
  %v72 = vld [vmem:[%s1 + $0x1c] sm:$0xf]
  %v73 = vld [vmem:[%s1 + $0x20] sm:$0xf]
  %v74 = vld [vmem:[%s1 + $0x24] sm:$0xf]
  %v75 = vld [vmem:[%s1 + $0x28] sm:$0xf]
  %v76 = vld [vmem:[%s1 + $0x2c] sm:$0xf]
  %v77 = vld [vmem:[%s1 + $0x30] sm:$0xf]
  %v78 = vld [vmem:[%s1 + $0x34] sm:$0xf]
  %v79 = vld [vmem:[%s1 + $0x38] sm:$0xf]
  %v80 = vld [vmem:[%s1 + $0x3c] sm:$0xf]
  %v97 = vunpack.c.l.b16 %v49
  %v98 = vunpack.c.l.b16 %v50
  %v99 = vunpack.c.l.b16 %v51
  %v100 = vunpack.c.l.b16 %v52
  %v101 = vunpack.c.l.b16 %v53
  %v102 = vunpack.c.l.b16 %v54
  %v103 = vunpack.c.l.b16 %v55
  %v104 = vunpack.c.l.b16 %v56
  %v105 = vunpack.c.l.b16 %v57
  %v106 = vunpack.c.l.b16 %v58
  %v107 = vunpack.c.l.b16 %v59
  %v108 = vunpack.c.l.b16 %v60
  %v109 = vunpack.c.l.b16 %v61
  %v110 = vunpack.c.l.b16 %v62
  %v111 = vunpack.c.l.b16 %v63
  %v112 = vunpack.c.l.b16 %v64
  %v113 = vpack.c.b16 %v98, %v97
  %v114 = vpack.c.b16 %v100, %v99
  %v115 = vpack.c.b16 %v102, %v101
  %v116 = vpack.c.b16 %v104, %v103
  %v117 = vpack.c.b16 %v106, %v105
  %v118 = vpack.c.b16 %v108, %v107
  %v119 = vpack.c.b16 %v110, %v109
  %v120 = vpack.c.b16 %v112, %v111
  %v145 = vunpack.c.l.b16 %v65
  %v146 = vunpack.c.l.b16 %v66
  %v147 = vunpack.c.l.b16 %v67
  %v148 = vunpack.c.l.b16 %v68
  %v149 = vunpack.c.l.b16 %v69
  %v150 = vunpack.c.l.b16 %v70
  %v151 = vunpack.c.l.b16 %v71
  %v152 = vunpack.c.l.b16 %v72
  %v153 = vunpack.c.l.b16 %v73
  %v154 = vunpack.c.l.b16 %v74
  %v155 = vunpack.c.l.b16 %v75
  %v156 = vunpack.c.l.b16 %v76
  %v157 = vunpack.c.l.b16 %v77
  %v158 = vunpack.c.l.b16 %v78
  %v159 = vunpack.c.l.b16 %v79
  %v160 = vunpack.c.l.b16 %v80
  %v161 = vpack.c.b16 %v146, %v145
  %v162 = vpack.c.b16 %v148, %v147
  %v163 = vpack.c.b16 %v150, %v149
  %v164 = vpack.c.b16 %v152, %v151
  %v165 = vpack.c.b16 %v154, %v153
  %v166 = vpack.c.b16 %v156, %v155
  %v167 = vpack.c.b16 %v158, %v157
  %v168 = vpack.c.b16 %v160, %v159
  %177 = vmatpush.bf16.msra.mxu0 %v168
  %178 = vmatpush.bf16.msra.mxu0 %v167
  %179 = vmatpush.bf16.msra.mxu0 %v166
  %180 = vmatpush.bf16.msra.mxu0 %v165
  %181 = vmatpush.bf16.msra.mxu0 %v164
  %182 = vmatpush.bf16.msra.mxu0 %v163
  %183 = vmatpush.bf16.msra.mxu0 %v162
  %184 = vmatpush.bf16.msra.mxu0 %v161
  %185 = vmatmul.bf16.gmra.mxu0 %v113
  %v186 = vpop.f32.mrf.mxu0
  %v187 = vadd.f32 0.0, %v186
  %v188 = vpop.f32.mrf.mxu0
  %v189 = vadd.f32 0.0, %v188
  %190 = vmatmul.bf16.gmra.mxu0 %v114
  %v191 = vpop.f32.mrf.mxu0
  %v192 = vadd.f32 0.0, %v191
  %v193 = vpop.f32.mrf.mxu0
  %v194 = vadd.f32 0.0, %v193
  %195 = vmatmul.bf16.gmra.mxu0 %v115
  %v196 = vpop.f32.mrf.mxu0
  %v197 = vadd.f32 0.0, %v196
  %v198 = vpop.f32.mrf.mxu0
  %v199 = vadd.f32 0.0, %v198
  %200 = vmatmul.bf16.gmra.mxu0 %v116
  %v201 = vpop.f32.mrf.mxu0
  %v202 = vadd.f32 0.0, %v201
  %v203 = vpop.f32.mrf.mxu0
  %v204 = vadd.f32 0.0, %v203
  %205 = vmatmul.bf16.gmra.mxu0 %v117
  %v206 = vpop.f32.mrf.mxu0
  %v207 = vadd.f32 0.0, %v206
  %v208 = vpop.f32.mrf.mxu0
  %v209 = vadd.f32 0.0, %v208
  %210 = vmatmul.bf16.gmra.mxu0 %v118
  %v211 = vpop.f32.mrf.mxu0
  %v212 = vadd.f32 0.0, %v211
  %v213 = vpop.f32.mrf.mxu0
  %v214 = vadd.f32 0.0, %v213
  %215 = vmatmul.bf16.gmra.mxu0 %v119
  %v216 = vpop.f32.mrf.mxu0
  %v217 = vadd.f32 0.0, %v216
  %v218 = vpop.f32.mrf.mxu0
  %v219 = vadd.f32 0.0, %v218
  %220 = vmatmul.bf16.gmra.mxu0 %v120
  %v221 = vpop.f32.mrf.mxu0
  %v222 = vadd.f32 0.0, %v221
  %v223 = vpop.f32.mrf.mxu0
  %v224 = vadd.f32 0.0, %v223
  %225 = vdwg.mxu0
  %v226 = vadd.f32 %v33, %v187
  %v227 = vadd.f32 %v34, %v189
  %v228 = vadd.f32 %v35, %v192
  %v229 = vadd.f32 %v36, %v194
  %v230 = vadd.f32 %v37, %v197
  %v231 = vadd.f32 %v38, %v199
  %v232 = vadd.f32 %v39, %v202
  %v233 = vadd.f32 %v40, %v204
  %v234 = vadd.f32 %v41, %v207
  %v235 = vadd.f32 %v42, %v209
  %v236 = vadd.f32 %v43, %v212
  %v237 = vadd.f32 %v44, %v214
  %v238 = vadd.f32 %v45, %v217
  %v239 = vadd.f32 %v46, %v219
  %v240 = vadd.f32 %v47, %v222
  %v241 = vadd.f32 %v48, %v224
  %242 = vst [vmem:[#allocation2] sm:$0xff] %v226
  %243 = vst [vmem:[#allocation2 + $0x8] sm:$0xff] %v227
  %244 = vst [vmem:[#allocation2 + $0x10] sm:$0xff] %v228
  %245 = vst [vmem:[#allocation2 + $0x18] sm:$0xff] %v229
  %246 = vst [vmem:[#allocation2 + $0x20] sm:$0xff] %v230
  %247 = vst [vmem:[#allocation2 + $0x28] sm:$0xff] %v231
  %248 = vst [vmem:[#allocation2 + $0x30] sm:$0xff] %v232
  %249 = vst [vmem:[#allocation2 + $0x38] sm:$0xff] %v233
  %250 = vst [vmem:[#allocation2 + $0x40] sm:$0xff] %v234
  %251 = vst [vmem:[#allocation2 + $0x48] sm:$0xff] %v235
  %252 = vst [vmem:[#allocation2 + $0x50] sm:$0xff] %v236
  %253 = vst [vmem:[#allocation2 + $0x58] sm:$0xff] %v237
  %254 = vst [vmem:[#allocation2 + $0x60] sm:$0xff] %v238
  %255 = vst [vmem:[#allocation2 + $0x68] sm:$0xff] %v239
  %256 = vst [vmem:[#allocation2 + $0x70] sm:$0xff] %v240
  %257 = vst [vmem:[#allocation2 + $0x78] sm:$0xff] %v241
  // Predicated region
  $region14: #{basic_block_forward.7} parent=0 // pred_check
    %p258 = pneg %p13
  $region15: #{basic_block_forward.7} parent=0 // pred_check_branch
    %260 = sbr.rel (%p258) target = $region17
  $region16: #{basic_block_forward.7} parent=0 // pred_region
    %v261 = vld [vmem:[#allocation2] sm:$0xff]
    %v262 = vld [vmem:[#allocation2 + $0x8] sm:$0xff]
    %v263 = vld [vmem:[#allocation2 + $0x10] sm:$0xff]
    %v264 = vld [vmem:[#allocation2 + $0x18] sm:$0xff]
    %v265 = vld [vmem:[#allocation2 + $0x20] sm:$0xff]
    %v266 = vld [vmem:[#allocation2 + $0x28] sm:$0xff]
    %v267 = vld [vmem:[#allocation2 + $0x30] sm:$0xff]
    %v268 = vld [vmem:[#allocation2 + $0x38] sm:$0xff]
    %v269 = vld [vmem:[#allocation2 + $0x40] sm:$0xff]
    %v270 = vld [vmem:[#allocation2 + $0x48] sm:$0xff]
    %v271 = vld [vmem:[#allocation2 + $0x50] sm:$0xff]
    %v272 = vld [vmem:[#allocation2 + $0x58] sm:$0xff]
    %v273 = vld [vmem:[#allocation2 + $0x60] sm:$0xff]
    %v274 = vld [vmem:[#allocation2 + $0x68] sm:$0xff]
    %v275 = vld [vmem:[#allocation2 + $0x70] sm:$0xff]
    %v276 = vld [vmem:[#allocation2 + $0x78] sm:$0xff]
    %v277 = vpack.c.bf16 %v261, %v261
    %v278 = vpack.c.bf16 %v262, %v262
    %v279 = vpack.c.bf16 %v263, %v263
    %v280 = vpack.c.bf16 %v264, %v264
    %v281 = vpack.c.bf16 %v265, %v265
    %v282 = vpack.c.bf16 %v266, %v266
    %v283 = vpack.c.bf16 %v267, %v267
    %v284 = vpack.c.bf16 %v268, %v268
    %v285 = vpack.c.bf16 %v269, %v269
    %v286 = vpack.c.bf16 %v270, %v270
    %v287 = vpack.c.bf16 %v271, %v271
    %v288 = vpack.c.bf16 %v272, %v272
    %v289 = vpack.c.bf16 %v273, %v273
    %v290 = vpack.c.bf16 %v274, %v274
    %v291 = vpack.c.bf16 %v275, %v275
    %v292 = vpack.c.bf16 %v276, %v276
    %293 = vst [vmem:[%s2] sm:$0xf] %v277
    %294 = vst [vmem:[%s2 + $0x4] sm:$0xf] %v278
    %295 = vst [vmem:[%s2 + $0x8] sm:$0xf] %v279
    %296 = vst [vmem:[%s2 + $0xc] sm:$0xf] %v280
    %297 = vst [vmem:[%s2 + $0x10] sm:$0xf] %v281
    %298 = vst [vmem:[%s2 + $0x14] sm:$0xf] %v282
    %299 = vst [vmem:[%s2 + $0x18] sm:$0xf] %v283
    %300 = vst [vmem:[%s2 + $0x1c] sm:$0xf] %v284
    %301 = vst [vmem:[%s2 + $0x20] sm:$0xf] %v285
    %302 = vst [vmem:[%s2 + $0x24] sm:$0xf] %v286
    %303 = vst [vmem:[%s2 + $0x28] sm:$0xf] %v287
    %304 = vst [vmem:[%s2 + $0x2c] sm:$0xf] %v288
    %305 = vst [vmem:[%s2 + $0x30] sm:$0xf] %v289
    %306 = vst [vmem:[%s2 + $0x34] sm:$0xf] %v290
    %307 = vst [vmem:[%s2 + $0x38] sm:$0xf] %v291
    %308 = vst [vmem:[%s2 + $0x3c] sm:$0xf] %v292
    %v309 = vadd.f32 %v261, %v262
    %v310 = vadd.f32 %v309, %v263
    %v311 = vadd.f32 %v310, %v264
    %v312 = vadd.f32 %v311, %v265
    %v313 = vadd.f32 %v312, %v266
    %v314 = vadd.f32 %v313, %v267
    %v315 = vadd.f32 %v314, %v268
    %v316 = vadd.f32 %v315, %v269
    %v317 = vadd.f32 %v316, %v270
    %v318 = vadd.f32 %v317, %v271
    %v319 = vadd.f32 %v318, %v272
    %v320 = vadd.f32 %v319, %v273
    %v321 = vadd.f32 %v320, %v274
    %v322 = vadd.f32 %v321, %v275
    %v323 = vadd.f32 %v322, %v276
    %v324 = vrot.slane %v323, 4
    %v325 = vadd.f32 %v323, %v324
    %v326 = vrot.slane %v325, 2
    %v327 = vadd.f32 %v325, %v326
    %v328 = vrot.slane %v327, 1
    %v329 = vadd.f32 %v327, %v328
    %v330 = vmul.f32 %v261, %v261
    %v331 = vmul.f32 %v262, %v262
    %v332 = vmul.f32 %v263, %v263
    %v333 = vmul.f32 %v264, %v264
    %v334 = vmul.f32 %v265, %v265
    %v335 = vmul.f32 %v266, %v266
    %v336 = vmul.f32 %v267, %v267
    %v337 = vmul.f32 %v268, %v268
    %v338 = vmul.f32 %v269, %v269
    %v339 = vmul.f32 %v270, %v270
    %v340 = vmul.f32 %v271, %v271
    %v341 = vmul.f32 %v272, %v272
    %v342 = vmul.f32 %v273, %v273
    %v343 = vmul.f32 %v274, %v274
    %v344 = vmul.f32 %v275, %v275
    %v345 = vmul.f32 %v276, %v276
    %v346 = vadd.f32 %v330, %v331
    %v347 = vadd.f32 %v346, %v332
    %v348 = vadd.f32 %v347, %v333
    %v349 = vadd.f32 %v348, %v334
    %v350 = vadd.f32 %v349, %v335
    %v351 = vadd.f32 %v350, %v336
    %v352 = vadd.f32 %v351, %v337
    %v353 = vadd.f32 %v352, %v338
    %v354 = vadd.f32 %v353, %v339
    %v355 = vadd.f32 %v354, %v340
    %v356 = vadd.f32 %v355, %v341
    %v357 = vadd.f32 %v356, %v342
    %v358 = vadd.f32 %v357, %v343
    %v359 = vadd.f32 %v358, %v344
    %v360 = vadd.f32 %v359, %v345
    %v361 = vrot.slane %v360, 4
    %v362 = vadd.f32 %v360, %v361
    %v363 = vrot.slane %v362, 2
    %v364 = vadd.f32 %v362, %v363
    %v365 = vrot.slane %v364, 1
    %v366 = vadd.f32 %v364, %v365
    %vm367 = vcmask 1040384
    %v368 = vsel %vm367, %v329, %v366
    %vm369 = vcmask 1041408
    %v370 = vsel %vm369, %v368, 0.0
    %371 = vst [vmem:[%s3] sm:$0xff] %v370
  $region17: #{basic_block_forward.7} parent=0 // pred_fallthru
    _
  // Predicated region
  $region18: #{basic_block_forward.7} parent=0 // pred_check
    _
  $region19: #{basic_block_forward.7} parent=0 // pred_check_branch
    %373 = sbr.rel (0) target = $region21
  $region20: #{basic_block_forward.7} parent=0 // pred_region
    _
  $region21: #{basic_block_forward.7} parent=0 // pred_fallthru
    _
  // Predicated region
  $region22: #{basic_block_forward.7} parent=0 // pred_check
    _
  $region23: #{basic_block_forward.7} parent=0 // pred_check_branch
    %375 = sbr.rel (0) target = $region25
  $region24: #{basic_block_forward.7} parent=0 // pred_region
    _
  $region25: #{basic_block_forward.7} parent=0 // pred_fallthru
    _
  // Predicated region
  $region26: #{basic_block_forward.7} parent=0 // pred_check
    _
  $region27: #{basic_block_forward.7} parent=0 // pred_check_branch
    %377 = sbr.rel (0) target = $region29
  $region28: #{basic_block_forward.7} parent=0 // pred_region
    _
  $region29: #{basic_block_forward.7} parent=0 // pred_fallthru
    _
  // Predicated region
  $region30: #{basic_block_forward.7} parent=0 // pred_check
    _
  $region31: #{basic_block_forward.7} parent=0 // pred_check_branch
    %379 = sbr.rel (0) target = $region33
  $region32: #{basic_block_forward.7} parent=0 // pred_region
    _
  $region33: #{basic_block_forward.7} parent=0 // pred_fallthru
    _

// kernel: basic_block_forward.9
$region0: #{basic_block_forward.9}
  #allocation0 [shape = 'u32[]', space=smem, size = 0x4, offset = 0x4, fixed_abs, tag = 'smem constant byte address 0x4 - core index']
  #allocation1 [shape = 'u32[72,128]{1,0:T(1,128)}', space=vmem, size = 0x9000, scoped, tag = 'internal scratch']
  %s0 = inlined_call_operand.vmem [shape: bf16[128,128], index: 0, kind: input, shape index: {}]
  %s1 = inlined_call_operand.vmem [shape: f32[1,128], index: 1, kind: input, shape index: {}]
  %s2 = inlined_call_operand.vmem [shape: f32[1,128], index: 2, kind: input, shape index: {}]
  %s3 = inlined_call_operand.vmem [shape: bf16[128,128], index: 3, kind: input, shape index: {}]
  %s4 = inlined_call_operand.vmem [shape: f32[1,128], index: 4, kind: input, shape index: {}]
  %s5 = inlined_call_operand.vmem [shape: f32[1,128], index: 5, kind: input, shape index: {}]
  %s6 = inlined_call_operand.vmem [shape: f32[128,128], index: 6, kind: output, shape index: {}]
  %s7 = sld [smem:[#allocation0]]
  $region34: #{basic_block_forward.9} parent=0
    _
  %s9 = ssub.s32 1, %s7
  %s10 = scalar_select 0, %s9, %s7
  // Predicated region
  $region2: #{basic_block_forward.9} parent=0 // pred_check
    _
  $region3: #{basic_block_forward.9} parent=0 // pred_check_branch
    %12 = sbr.rel (0) target = $region5
  $region4: #{basic_block_forward.9} parent=0 // pred_region
    _
  $region5: #{basic_block_forward.9} parent=0 // pred_fallthru
    _
  // Predicated region
  $region6: #{basic_block_forward.9} parent=0 // pred_check
    _
  $region7: #{basic_block_forward.9} parent=0 // pred_check_branch
    %14 = sbr.rel (0) target = $region9
  $region8: #{basic_block_forward.9} parent=0 // pred_region
    _
  $region9: #{basic_block_forward.9} parent=0 // pred_fallthru
    _
  // Predicated region
  $region10: #{basic_block_forward.9} parent=0 // pred_check
    _
  $region11: #{basic_block_forward.9} parent=0 // pred_check_branch
    %16 = sbr.rel (0) target = $region13
  $region12: #{basic_block_forward.9} parent=0 // pred_region
    _
  $region13: #{basic_block_forward.9} parent=0 // pred_fallthru
    _
  // Predicated region
  $region14: #{basic_block_forward.9} parent=0 // pred_check
    _
  $region15: #{basic_block_forward.9} parent=0 // pred_check_branch
    %18 = sbr.rel (0) target = $region17
  $region16: #{basic_block_forward.9} parent=0 // pred_region
    _
  $region17: #{basic_block_forward.9} parent=0 // pred_fallthru
    _
  // Predicated region
  $region18: #{basic_block_forward.9} parent=0 // pred_check
    _
  $region19: #{basic_block_forward.9} parent=0 // pred_check_branch
    %20 = sbr.rel (0) target = $region21
  $region20: #{basic_block_forward.9} parent=0 // pred_region
    _
  $region21: #{basic_block_forward.9} parent=0 // pred_fallthru
    _
  // Predicated region
  $region22: #{basic_block_forward.9} parent=0 // pred_check
    _
  $region23: #{basic_block_forward.9} parent=0 // pred_check_branch
    %22 = sbr.rel (0) target = $region25
  $region24: #{basic_block_forward.9} parent=0 // pred_region
    _
  $region25: #{basic_block_forward.9} parent=0 // pred_fallthru
    _
  %v23 = vld [vmem:[%s0] sm:$0xf]
  %v24 = vld [vmem:[%s0 + $0x4] sm:$0xf]
  %v25 = vld [vmem:[%s0 + $0x8] sm:$0xf]
  %v26 = vld [vmem:[%s0 + $0xc] sm:$0xf]
  %v27 = vld [vmem:[%s0 + $0x10] sm:$0xf]
  %v28 = vld [vmem:[%s0 + $0x14] sm:$0xf]
  %v29 = vld [vmem:[%s0 + $0x18] sm:$0xf]
  %v30 = vld [vmem:[%s0 + $0x1c] sm:$0xf]
  %v31 = vld [vmem:[%s0 + $0x20] sm:$0xf]
  %v32 = vld [vmem:[%s0 + $0x24] sm:$0xf]
  %v33 = vld [vmem:[%s0 + $0x28] sm:$0xf]
  %v34 = vld [vmem:[%s0 + $0x2c] sm:$0xf]
  %v35 = vld [vmem:[%s0 + $0x30] sm:$0xf]
  %v36 = vld [vmem:[%s0 + $0x34] sm:$0xf]
  %v37 = vld [vmem:[%s0 + $0x38] sm:$0xf]
  %v38 = vld [vmem:[%s0 + $0x3c] sm:$0xf]
  %v39 = vunpack.c.l.bf16 %v23
  %v40 = vunpack.c.l.bf16 %v24
  %v41 = vunpack.c.l.bf16 %v25
  %v42 = vunpack.c.l.bf16 %v26
  %v43 = vunpack.c.l.bf16 %v27
  %v44 = vunpack.c.l.bf16 %v28
  %v45 = vunpack.c.l.bf16 %v29
  %v46 = vunpack.c.l.bf16 %v30
  %v47 = vunpack.c.l.bf16 %v31
  %v48 = vunpack.c.l.bf16 %v32
  %v49 = vunpack.c.l.bf16 %v33
  %v50 = vunpack.c.l.bf16 %v34
  %v51 = vunpack.c.l.bf16 %v35
  %v52 = vunpack.c.l.bf16 %v36
  %v53 = vunpack.c.l.bf16 %v37
  %v54 = vunpack.c.l.bf16 %v38
  %v55 = vld [vmem:[%s1] sm:$0x1]
  %v57 = vperm.slane %v55, 0
  %v59 = vmul.f32 %v39, %v57
  %v60 = vmul.f32 %v40, %v57
  %v61 = vmul.f32 %v41, %v57
  %v62 = vmul.f32 %v42, %v57
  %v63 = vmul.f32 %v43, %v57
  %v64 = vmul.f32 %v44, %v57
  %v65 = vmul.f32 %v45, %v57
  %v66 = vmul.f32 %v46, %v57
  %v67 = vmul.f32 %v47, %v57
  %v68 = vmul.f32 %v48, %v57
  %v69 = vmul.f32 %v49, %v57
  %v70 = vmul.f32 %v50, %v57
  %v71 = vmul.f32 %v51, %v57
  %v72 = vmul.f32 %v52, %v57
  %v73 = vmul.f32 %v53, %v57
  %v74 = vmul.f32 %v54, %v57
  %v75 = vld [vmem:[%s2] sm:$0x1]
  %v77 = vperm.slane %v75, 0
  %v79 = vadd.f32 %v59, %v77
  %v80 = vadd.f32 %v60, %v77
  %v81 = vadd.f32 %v61, %v77
  %v82 = vadd.f32 %v62, %v77
  %v83 = vadd.f32 %v63, %v77
  %v84 = vadd.f32 %v64, %v77
  %v85 = vadd.f32 %v65, %v77
  %v86 = vadd.f32 %v66, %v77
  %v87 = vadd.f32 %v67, %v77
  %v88 = vadd.f32 %v68, %v77
  %v89 = vadd.f32 %v69, %v77
  %v90 = vadd.f32 %v70, %v77
  %v91 = vadd.f32 %v71, %v77
  %v92 = vadd.f32 %v72, %v77
  %v93 = vadd.f32 %v73, %v77
  %v94 = vadd.f32 %v74, %v77
  %v95 = vld [vmem:[%s3] sm:$0xf]
  %v96 = vld [vmem:[%s3 + $0x4] sm:$0xf]
  %v97 = vld [vmem:[%s3 + $0x8] sm:$0xf]
  %v98 = vld [vmem:[%s3 + $0xc] sm:$0xf]
  %v99 = vld [vmem:[%s3 + $0x10] sm:$0xf]
  %v100 = vld [vmem:[%s3 + $0x14] sm:$0xf]
  %v101 = vld [vmem:[%s3 + $0x18] sm:$0xf]
  %v102 = vld [vmem:[%s3 + $0x1c] sm:$0xf]
  %v103 = vld [vmem:[%s3 + $0x20] sm:$0xf]
  %v104 = vld [vmem:[%s3 + $0x24] sm:$0xf]
  %v105 = vld [vmem:[%s3 + $0x28] sm:$0xf]
  %v106 = vld [vmem:[%s3 + $0x2c] sm:$0xf]
  %v107 = vld [vmem:[%s3 + $0x30] sm:$0xf]
  %v108 = vld [vmem:[%s3 + $0x34] sm:$0xf]
  %v109 = vld [vmem:[%s3 + $0x38] sm:$0xf]
  %v110 = vld [vmem:[%s3 + $0x3c] sm:$0xf]
  %v111 = vunpack.c.l.bf16 %v95
  %v112 = vunpack.c.l.bf16 %v96
  %v113 = vunpack.c.l.bf16 %v97
  %v114 = vunpack.c.l.bf16 %v98
  %v115 = vunpack.c.l.bf16 %v99
  %v116 = vunpack.c.l.bf16 %v100
  %v117 = vunpack.c.l.bf16 %v101
  %v118 = vunpack.c.l.bf16 %v102
  %v119 = vunpack.c.l.bf16 %v103
  %v120 = vunpack.c.l.bf16 %v104
  %v121 = vunpack.c.l.bf16 %v105
  %v122 = vunpack.c.l.bf16 %v106
  %v123 = vunpack.c.l.bf16 %v107
  %v124 = vunpack.c.l.bf16 %v108
  %v125 = vunpack.c.l.bf16 %v109
  %v126 = vunpack.c.l.bf16 %v110
  %v127 = vld [vmem:[%s4] sm:$0x1]
  %v129 = vperm.slane %v127, 0
  %v131 = vmul.f32 %v111, %v129
  %v132 = vmul.f32 %v112, %v129
  %v133 = vmul.f32 %v113, %v129
  %v134 = vmul.f32 %v114, %v129
  %v135 = vmul.f32 %v115, %v129
  %v136 = vmul.f32 %v116, %v129
  %v137 = vmul.f32 %v117, %v129
  %v138 = vmul.f32 %v118, %v129
  %v139 = vmul.f32 %v119, %v129
  %v140 = vmul.f32 %v120, %v129
  %v141 = vmul.f32 %v121, %v129
  %v142 = vmul.f32 %v122, %v129
  %v143 = vmul.f32 %v123, %v129
  %v144 = vmul.f32 %v124, %v129
  %v145 = vmul.f32 %v125, %v129
  %v146 = vmul.f32 %v126, %v129
  %v147 = vadd.f32 %v79, %v131
  %v148 = vadd.f32 %v80, %v132
  %v149 = vadd.f32 %v81, %v133
  %v150 = vadd.f32 %v82, %v134
  %v151 = vadd.f32 %v83, %v135
  %v152 = vadd.f32 %v84, %v136
  %v153 = vadd.f32 %v85, %v137
  %v154 = vadd.f32 %v86, %v138
  %v155 = vadd.f32 %v87, %v139
  %v156 = vadd.f32 %v88, %v140
  %v157 = vadd.f32 %v89, %v141
  %v158 = vadd.f32 %v90, %v142
  %v159 = vadd.f32 %v91, %v143
  %v160 = vadd.f32 %v92, %v144
  %v161 = vadd.f32 %v93, %v145
  %v162 = vadd.f32 %v94, %v146
  %v163 = vld [vmem:[%s5] sm:$0x1]
  %v165 = vperm.slane %v163, 0
  %v167 = vadd.f32 %v147, %v165
  %v168 = vadd.f32 %v148, %v165
  %v169 = vadd.f32 %v149, %v165
  %v170 = vadd.f32 %v150, %v165
  %v171 = vadd.f32 %v151, %v165
  %v172 = vadd.f32 %v152, %v165
  %v173 = vadd.f32 %v153, %v165
  %v174 = vadd.f32 %v154, %v165
  %v175 = vadd.f32 %v155, %v165
  %v176 = vadd.f32 %v156, %v165
  %v177 = vadd.f32 %v157, %v165
  %v178 = vadd.f32 %v158, %v165
  %v179 = vadd.f32 %v159, %v165
  %v180 = vadd.f32 %v160, %v165
  %v181 = vadd.f32 %v161, %v165
  %v182 = vadd.f32 %v162, %v165
  %v183 = vmax.f32 %v167, 0.0
  %v184 = vmax.f32 %v168, 0.0
  %v185 = vmax.f32 %v169, 0.0
  %v186 = vmax.f32 %v170, 0.0
  %v187 = vmax.f32 %v171, 0.0
  %v188 = vmax.f32 %v172, 0.0
  %v189 = vmax.f32 %v173, 0.0
  %v190 = vmax.f32 %v174, 0.0
  %v191 = vmax.f32 %v175, 0.0
  %v192 = vmax.f32 %v176, 0.0
  %v193 = vmax.f32 %v177, 0.0
  %v194 = vmax.f32 %v178, 0.0
  %v195 = vmax.f32 %v179, 0.0
  %v196 = vmax.f32 %v180, 0.0
  %v197 = vmax.f32 %v181, 0.0
  %v198 = vmax.f32 %v182, 0.0
  %199 = vst [vmem:[%s6] sm:$0xff] %v183
  %200 = vst [vmem:[%s6 + $0x8] sm:$0xff] %v184
  %201 = vst [vmem:[%s6 + $0x10] sm:$0xff] %v185
  %202 = vst [vmem:[%s6 + $0x18] sm:$0xff] %v186
  %203 = vst [vmem:[%s6 + $0x20] sm:$0xff] %v187
  %204 = vst [vmem:[%s6 + $0x28] sm:$0xff] %v188
  %205 = vst [vmem:[%s6 + $0x30] sm:$0xff] %v189
  %206 = vst [vmem:[%s6 + $0x38] sm:$0xff] %v190
  %207 = vst [vmem:[%s6 + $0x40] sm:$0xff] %v191
  %208 = vst [vmem:[%s6 + $0x48] sm:$0xff] %v192
  %209 = vst [vmem:[%s6 + $0x50] sm:$0xff] %v193
  %210 = vst [vmem:[%s6 + $0x58] sm:$0xff] %v194
  %211 = vst [vmem:[%s6 + $0x60] sm:$0xff] %v195
  %212 = vst [vmem:[%s6 + $0x68] sm:$0xff] %v196
  %213 = vst [vmem:[%s6 + $0x70] sm:$0xff] %v197
  %214 = vst [vmem:[%s6 + $0x78] sm:$0xff] %v198
  // Predicated region
  $region26: #{basic_block_forward.9} parent=0 // pred_check
    _
  $region27: #{basic_block_forward.9} parent=0 // pred_check_branch
    %216 = sbr.rel (0) target = $region29
  $region28: #{basic_block_forward.9} parent=0 // pred_region
    _
  $region29: #{basic_block_forward.9} parent=0 // pred_fallthru
    _
  // Predicated region
  $region30: #{basic_block_forward.9} parent=0 // pred_check
    _
  $region31: #{basic_block_forward.9} parent=0 // pred_check_branch
    %218 = sbr.rel (0) target = $region33
  $region32: #{basic_block_forward.9} parent=0 // pred_region
    _
  $region33: #{basic_block_forward.9} parent=0 // pred_fallthru
    _

</llo_original>
